<compile_context>
chip_gen: v6e
topology: v6e:2x2x1
jax: 0.10.0
libtpu: 0.0.40
codegen_flags: <defaults>
</compile_context>

<pallas_src>
import jax
import jax.numpy as jnp
from jax.experimental import pallas as pl
from jax.experimental.pallas import tpu as pltpu


# ---------------------------------------------------------------------------
# helpers
# ---------------------------------------------------------------------------
def _pick_tile(dim, target, granule):
    """Largest tile <= target that divides `dim` and is a multiple of `granule`.
    Falls back to the full dimension (always a legal block extent)."""
    if dim <= target:
        return dim
    t = (target // granule) * granule
    while t >= granule:
        if dim % t == 0:
            return t
        t -= granule
    return dim


def _vmem_limit_bytes():
    """Raise the scoped-VMEM limit while leaving headroom below physical VMEM
    (64 MiB on v7x, 128 MiB on v5e/v6e)."""
    try:
        cap = int(pltpu.get_tpu_info().vmem_capacity_bytes)
        if cap > 0:
            return min(cap * 3 // 4, 100 * 1024 * 1024)
    except Exception:
        pass
    return 48 * 1024 * 1024


# ---------------------------------------------------------------------------
# Fused / tiled linear projections:  y_i = x @ W_i.T + b_i   (shared x tiles)
# ---------------------------------------------------------------------------
def _make_fused_linear_kernel(n_proj):
    def kernel(*refs):
        x_ref = refs[0]
        w_refs = refs[1:1 + n_proj]
        b_refs = refs[1 + n_proj:1 + 2 * n_proj]
        o_refs = refs[1 + 2 * n_proj:1 + 3 * n_proj]
        acc_refs = refs[1 + 3 * n_proj:]
        k = pl.program_id(2)

        @pl.when(k == 0)
        def _init():
            for acc in acc_refs:
                acc[...] = jnp.zeros(acc.shape, acc.dtype)

        x = x_ref[...]
        for w_ref, acc in zip(w_refs, acc_refs):
            # x(tm,tk) @ w(tn,tk) contracting the minor dims: no XLU transpose,
            # MXU accumulates in f32.
            acc[...] += jax.lax.dot_general(
                x, w_ref[...], (((1,), (1,)), ((), ())),
                preferred_element_type=jnp.float32)

        @pl.when(k == pl.num_programs(2) - 1)
        def _finalize():
            for b_ref, o_ref, acc in zip(b_refs, o_refs, acc_refs):
                o_ref[...] = (acc[...] + b_ref[...].astype(jnp.float32)
                              ).astype(o_ref.dtype)

    return kernel


def fused_linear(x2d, weights, biases, *, tm_target=256, tn_target=256,
                 tk_target=512):
    """Compute [x @ w.T + b for w, b in zip(weights, biases)] in ONE pallas_call.

    x2d: (M, K); each w: (N, K); each b: (N,).  Returns list of (M, N) arrays.
    """
    M, K = x2d.shape
    N = weights[0].shape[0]
    n_proj = len(weights)
    weights = [w.astype(x2d.dtype) for w in weights]          # F.linear dtype cast
    biases = [b.astype(x2d.dtype).reshape(1, N) for b in biases]

    tm = _pick_tile(M, tm_target, 8)
    tn = _pick_tile(N, tn_target, 128)
    tk = _pick_tile(K, tk_target, 128)

    x_spec = pl.BlockSpec((tm, tk), lambda i, j, k: (i, k))
    w_spec = pl.BlockSpec((tn, tk), lambda i, j, k: (j, k))
    b_spec = pl.BlockSpec((1, tn), lambda i, j, k: (0, j))
    o_spec = pl.BlockSpec((tm, tn), lambda i, j, k: (i, j))

    outs = pl.pallas_call(
        _make_fused_linear_kernel(n_proj),
        out_shape=tuple(jax.ShapeDtypeStruct((M, N), x2d.dtype)
                        for _ in range(n_proj)),
        grid=(M // tm, N // tn, K // tk),
        in_specs=[x_spec] + [w_spec] * n_proj + [b_spec] * n_proj,
        out_specs=tuple(o_spec for _ in range(n_proj)),
        scratch_shapes=[pltpu.VMEM((tm, tn), jnp.float32) for _ in range(n_proj)],
        compiler_params=pltpu.CompilerParams(
            dimension_semantics=("parallel", "parallel", "arbitrary"),
            vmem_limit_bytes=_vmem_limit_bytes()),
    )(x2d, *weights, *biases)
    if not isinstance(outs, (list, tuple)):
        outs = [outs]
    return list(outs)


# ---------------------------------------------------------------------------
# Flash-style multi-head attention (all heads per grid step, (B,T,H,D) layout)
# ---------------------------------------------------------------------------
def _make_attention_kernel(*, scale, causal, has_mask, return_qk, tq, tk):
    def kernel(*refs):
        q_ref, k_ref, v_ref = refs[0], refs[1], refs[2]
        pos = 3
        mask_ref = refs[pos] if has_mask else None
        pos += int(has_mask)
        o_ref = refs[pos]
        pos += 1
        qk_ref = refs[pos] if return_qk else None
        pos += int(return_qk)
        m_sc, l_sc, acc_sc = refs[pos], refs[pos + 1], refs[pos + 2]

        i = pl.program_id(1)   # q-tile index
        j = pl.program_id(2)   # kv-tile index (reduction axis, "arbitrary")

        @pl.when(j == 0)
        def _init():
            m_sc[...] = jnp.full(m_sc.shape, -jnp.inf, dtype=m_sc.dtype)
            l_sc[...] = jnp.zeros(l_sc.shape, dtype=l_sc.dtype)
            acc_sc[...] = jnp.zeros(acc_sc.shape, dtype=acc_sc.dtype)

        def _compute():
            # tiles arrive as (tq,H,D)/(tk,H,D); swap to head-major for the
            # batched MXU matmuls (operands stay in their native dtype, f32 acc).
            qh = jnp.swapaxes(q_ref[...], 0, 1) * scale        # (H, tq, D)
            kh = jnp.swapaxes(k_ref[...], 0, 1)                # (H, tk, D)
            vh = jnp.swapaxes(v_ref[...], 0, 1)                # (H, tk, D)
            s = jnp.einsum("hqd,hkd->hqk", qh, kh,
                           preferred_element_type=jnp.float32)  # (H, tq, tk)

            if causal:
                row = i * tq + jax.lax.broadcasted_iota(jnp.int32, (tq, tk), 0)
                col = j * tk + jax.lax.broadcasted_iota(jnp.int32, (tq, tk), 1)
                s = jnp.where((col <= row)[None, :, :], s, -jnp.inf)
            elif has_mask:
                s = s + mask_ref[...][None, :, :].astype(jnp.float32)

            if return_qk:
                qk_ref[...] = s                                 # streamed per tile

            # online softmax
            m_prev = m_sc[...]
            m_new = jnp.maximum(m_prev, s.max(axis=-1, keepdims=True))
            alpha = jnp.exp(m_prev - m_new)
            p = jnp.exp(s - m_new)
            l_sc[...] = alpha * l_sc[...] + p.sum(axis=-1, keepdims=True)
            acc_sc[...] = alpha * acc_sc[...] + jnp.einsum(
                "hqk,hkd->hqd", p.astype(vh.dtype), vh,
                preferred_element_type=jnp.float32)
            m_sc[...] = m_new

        if causal and not return_qk:
            # flash path: skip KV tiles that lie entirely above the diagonal
            pl.when(j * tk < (i + 1) * tq)(_compute)
        else:
            _compute()

        @pl.when(j == pl.num_programs(2) - 1)
        def _finalize():
            inv_l = pl.reciprocal(l_sc[...], approx=True)       # EUP, frees VALU
            o_ref[...] = jnp.swapaxes(acc_sc[...] * inv_l, 0, 1).astype(o_ref.dtype)

    return kernel


def attention_pallas(q4, k4, v4, *, scale, causal=False, mask=None,
                     return_qk=True, tq_target=256, tk_target=512):
    """q4: (B,Tq,H,D); k4,v4: (B,Tk,H,D); mask: optional (Tq,Tk) f32 additive.

    Returns (o4 (B,Tq,H,D), qk (B,H,Tq,Tk) f32 or None)."""
    B, Tq, H, D = q4.shape
    Tk = k4.shape[1]
    tq = _pick_tile(Tq, tq_target, 8)      # 2nd-minor of the qk output block
    tk = _pick_tile(Tk, tk_target, 128)    # minor dim of the qk output block
    has_mask = mask is not None
    sq = pl.Squeezed()

    in_specs = [
        pl.BlockSpec((sq, tq, H, D), lambda b, i, j: (b, i, 0, 0)),
        pl.BlockSpec((sq, tk, H, D), lambda b, i, j: (b, j, 0, 0)),
        pl.BlockSpec((sq, tk, H, D), lambda b, i, j: (b, j, 0, 0)),
    ]
    args = [q4, k4, v4]
    if has_mask:
        in_specs.append(pl.BlockSpec((tq, tk), lambda b, i, j: (i, j)))
        args.append(mask)

    o_spec = pl.BlockSpec((sq, tq, H, D), lambda b, i, j: (b, i, 0, 0))
    if return_qk:
        out_shape = (jax.ShapeDtypeStruct((B, Tq, H, D), q4.dtype),
                     jax.ShapeDtypeStruct((B, H, Tq, Tk), jnp.float32))
        out_specs = (o_spec,
                     pl.BlockSpec((sq, H, tq, tk), lambda b, i, j: (b, 0, i, j)))
    else:
        out_shape = jax.ShapeDtypeStruct((B, Tq, H, D), q4.dtype)
        out_specs = o_spec

    kernel = _make_attention_kernel(scale=scale, causal=causal, has_mask=has_mask,
                                    return_qk=return_qk, tq=tq, tk=tk)
    outs = pl.pallas_call(
        kernel,
        out_shape=out_shape,
        grid=(B, Tq // tq, Tk // tk),
        in_specs=in_specs,
        out_specs=out_specs,
        scratch_shapes=[pltpu.VMEM((H, tq, 1), jnp.float32),   # running max
                        pltpu.VMEM((H, tq, 1), jnp.float32),   # running sum
                        pltpu.VMEM((H, tq, D), jnp.float32)],  # output accumulator
        compiler_params=pltpu.CompilerParams(
            dimension_semantics=("parallel", "parallel", "arbitrary"),
            vmem_limit_bytes=_vmem_limit_bytes()),
    )(*args)

    if return_qk:
        return outs[0], outs[1]
    return outs, None


# ---------------------------------------------------------------------------
# MultiHeadAttention.forward
# ---------------------------------------------------------------------------
def mha_forward(x, params, n_head, xa=None, mask=None, causal=False,
                return_qk=True):
    """Returns (out, qk) like MultiHeadAttention.forward.

    causal=True generates the whisper -inf upper-triangle mask in-kernel
    (equivalent to passing the standard causal mask array, but no mask DMA).
    return_qk=False uses the flash path and returns qk=None.
    """
    # TODO(synk): kv_cache dict reuse, loralib.Linear (lora>0) and the ilm='avgh'
    # branch are stateful / training-only paths not implemented here; dropout is
    # identity (p=0, eval mode).
    B, Tq, C = x.shape
    H = n_head
    D = C // H
    scale = float(D) ** (-0.5)            # fold both D**-0.25 factors into q only

    zeros_bias = jnp.zeros((C,), x.dtype)  # key projection has no bias
    if xa is None:
        q2, k2, v2 = fused_linear(
            x.reshape(B * Tq, C),
            [params["wq"], params["wk"], params["wv"]],
            [params["bq"], zeros_bias, params["bv"]])
        Tk = Tq
    else:
        Tk = xa.shape[1]
        q2 = fused_linear(x.reshape(B * Tq, C), [params["wq"]], [params["bq"]])[0]
        k2, v2 = fused_linear(xa.reshape(B * Tk, C),
                              [params["wk"], params["wv"]],
                              [zeros_bias, params["bv"]])

    # head split is a free reshape: (B*T, C) -> (B, T, H, D); no transpose passes.
    q4 = q2.reshape(B, Tq, H, D)
    k4 = k2.reshape(B, Tk, H, D)
    v4 = v2.reshape(B, Tk, H, D)

    mask_arr = None
    if (mask is not None) and not causal:
        # NOTE: PyTorch slices mask[:n_ctx, :n_ctx]; we slice [:Tq, :Tk] so a
        # user-provided mask stays shape-safe for cross-attention as well.
        mask_arr = jnp.asarray(mask, jnp.float32)[:Tq, :Tk]

    o4, qk = attention_pallas(q4, k4, v4, scale=scale, causal=causal,
                              mask=mask_arr, return_qk=return_qk)

    # merge heads is a free reshape; out projection is another tiled linear.
    out2 = fused_linear(o4.reshape(B * Tq, C), [params["wo"]], [params["bo"]])[0]
    return out2.reshape(B, Tq, C), qk


# ---------------------------------------------------------------------------
# Pure-JAX reference (mirrors the PyTorch math) for validation
# ---------------------------------------------------------------------------
def _reference(x, params, n_head, xa=None, mask=None):
    B, Tq, C = x.shape
    src = x if xa is None else xa
    Tk = src.shape[1]
    D = C // n_head
    scale = D ** (-0.25)
    q = x @ params["wq"].T + params["bq"]
    k = src @ params["wk"].T
    v = src @ params["wv"].T + params["bv"]
    qh = q.reshape(B, Tq, n_head, D).transpose(0, 2, 1, 3) * scale
    kh = k.reshape(B, Tk, n_head, D).transpose(0, 2, 3, 1) * scale
    vh = v.reshape(B, Tk, n_head, D).transpose(0, 2, 1, 3)
    qk = qh @ kh
    if mask is not None:
        qk = qk + mask[:Tq, :Tq]
    qk = qk.astype(jnp.float32)
    w = jax.nn.softmax(qk, axis=-1)
    wv = jnp.einsum("bhqk,bhkd->bhqd", w, vh).transpose(0, 2, 1, 3).reshape(B, Tq, C)
    out = wv @ params["wo"].T + params["bo"]
    return out, qk


if __name__ == "__main__":
    B, T, n_state, n_head = 2, 8, 32, 4
    T_xa = 16

    key = jax.random.PRNGKey(0)
    ks = jax.random.split(key, 9)
    x = jax.random.normal(ks[0], (B, T, n_state), jnp.float32)
    xa = jax.random.normal(ks[8], (B, T_xa, n_state), jnp.float32)
    params = {
        "wq": jax.random.normal(ks[1], (n_state, n_state), jnp.float32) * 0.1,
        "bq": jax.random.normal(ks[2], (n_state,), jnp.float32) * 0.1,
        "wk": jax.random.normal(ks[3], (n_state, n_state), jnp.float32) * 0.1,
        "wv": jax.random.normal(ks[4], (n_state, n_state), jnp.float32) * 0.1,
        "bv": jax.random.normal(ks[5], (n_state,), jnp.float32) * 0.1,
        "wo": jax.random.normal(ks[6], (n_state, n_state), jnp.float32) * 0.1,
        "bo": jax.random.normal(ks[7], (n_state,), jnp.float32) * 0.1,
    }
    # whisper-style causal mask (strict upper triangle = -inf)
    mask = jnp.triu(jnp.full((T, T), -jnp.inf, jnp.float32), k=1)

    # 1) self-attention with an explicit mask array (mask DMA path)
    out1, qk1 = mha_forward(x, params, n_head, mask=mask)
    # 2) self-attention with the in-kernel causal mask (preferred fast path)
    out2, qk2 = mha_forward(x, params, n_head, causal=True)
    # 3) flash path: no qk materialization, masked-KV-tile skipping
    out3, qk3 = mha_forward(x, params, n_head, causal=True, return_qk=False)
    # 4) cross-attention, no mask
    out4, qk4 = mha_forward(x, params, n_head, xa=xa)
    jax.block_until_ready((out1, qk1, out2, qk2, out3, out4, qk4))

    ref_out, ref_qk = _reference(x, params, n_head, mask=mask)
    ref_xo, ref_xqk = _reference(x, params, n_head, xa=xa)

    assert out1.shape == (B, T, n_state) and qk1.shape == (B, n_head, T, T)
    assert qk4.shape == (B, n_head, T, T_xa)
    assert qk3 is None

    # out goes through the EUP approximate reciprocal -> slightly relaxed tol.
    for o in (out1, out2, out3):
        assert jnp.allclose(o, ref_out, atol=2e-3, rtol=2e-3)
    for qq in (qk1, qk2):
        assert jnp.allclose(qq, ref_qk, atol=1e-4, rtol=1e-4)
    assert jnp.allclose(out4, ref_xo, atol=2e-3, rtol=2e-3)
    assert jnp.allclose(qk4, ref_xqk, atol=1e-4, rtol=1e-4)

    print("KERNEL_OK")
</pallas_src>

<mosaic_0001>
module attributes {stable_mosaic.version = 11 : i64} {
  func.func @kernel(%arg0: i32, %arg1: i32, %arg2: i32, %arg3: memref<16x32xf32, #tpu.memory_space<vmem>>, %arg4: memref<32x32xf32, #tpu.memory_space<vmem>>, %arg5: memref<32x32xf32, #tpu.memory_space<vmem>>, %arg6: memref<32x32xf32, #tpu.memory_space<vmem>>, %arg7: memref<1x32xf32, #tpu.memory_space<vmem>>, %arg8: memref<1x32xf32, #tpu.memory_space<vmem>>, %arg9: memref<1x32xf32, #tpu.memory_space<vmem>>, %arg10: memref<16x32xf32, #tpu.memory_space<vmem>>, %arg11: memref<16x32xf32, #tpu.memory_space<vmem>>, %arg12: memref<16x32xf32, #tpu.memory_space<vmem>>, %arg13: memref<16x32xf32, #tpu.memory_space<vmem>>, %arg14: memref<16x32xf32, #tpu.memory_space<vmem>>, %arg15: memref<16x32xf32, #tpu.memory_space<vmem>>) attributes {dimension_semantics = [#tpu.dimension_semantics<parallel>, #tpu.dimension_semantics<parallel>, #tpu.dimension_semantics<arbitrary>], iteration_bounds = array<i64: 1, 1, 1>, scalar_prefetch = 0 : i64, scratch_operands = 3 : i64, tpu.core_type = #tpu.core_type<tc>, window_params = [{transform_indices = @transform_0, window_bounds = array<i64: 16, 32>}, {transform_indices = @transform_1, window_bounds = array<i64: 32, 32>}, {transform_indices = @transform_2, window_bounds = array<i64: 32, 32>}, {transform_indices = @transform_3, window_bounds = array<i64: 32, 32>}, {transform_indices = @transform_4, window_bounds = array<i64: 1, 32>}, {transform_indices = @transform_5, window_bounds = array<i64: 1, 32>}, {transform_indices = @transform_6, window_bounds = array<i64: 1, 32>}, {transform_indices = @transform_7, window_bounds = array<i64: 16, 32>}, {transform_indices = @transform_8, window_bounds = array<i64: 16, 32>}, {transform_indices = @transform_9, window_bounds = array<i64: 16, 32>}]} {
    %c0_i32 = arith.constant 0 : i32
    %0 = arith.cmpi eq, %arg2, %c0_i32 : i32
    %1 = arith.extui %0 : i1 to i32
    %c0_i32_0 = arith.constant 0 : i32
    %2 = arith.cmpi ne, %1, %c0_i32_0 : i32
    scf.if %2 {
      %cst_24 = arith.constant 0.000000e+00 : f32
      %22 = vector.broadcast %cst_24 : f32 to vector<16x32xf32>
      %c0_25 = arith.constant 0 : index
      %c0_26 = arith.constant 0 : index
      %23 = vector.load %arg13[%c0_25, %c0_26] : memref<16x32xf32, #tpu.memory_space<vmem>>, vector<16x32xf32>
      tpu.vector_store %arg13[%c0_25, %c0_26], %22 {strides = array<i32>} : memref<16x32xf32, #tpu.memory_space<vmem>>, vector<16x32xf32>,
      %cst_27 = arith.constant 0.000000e+00 : f32
      %24 = vector.broadcast %cst_27 : f32 to vector<16x32xf32>
      %c0_28 = arith.constant 0 : index
      %c0_29 = arith.constant 0 : index
      %25 = vector.load %arg14[%c0_28, %c0_29] : memref<16x32xf32, #tpu.memory_space<vmem>>, vector<16x32xf32>
      tpu.vector_store %arg14[%c0_28, %c0_29], %24 {strides = array<i32>} : memref<16x32xf32, #tpu.memory_space<vmem>>, vector<16x32xf32>,
      %cst_30 = arith.constant 0.000000e+00 : f32
      %26 = vector.broadcast %cst_30 : f32 to vector<16x32xf32>
      %c0_31 = arith.constant 0 : index
      %c0_32 = arith.constant 0 : index
      %27 = vector.load %arg15[%c0_31, %c0_32] : memref<16x32xf32, #tpu.memory_space<vmem>>, vector<16x32xf32>
      tpu.vector_store %arg15[%c0_31, %c0_32], %26 {strides = array<i32>} : memref<16x32xf32, #tpu.memory_space<vmem>>, vector<16x32xf32>,
    } else {
    }
    %c0 = arith.constant 0 : index
    %c0_1 = arith.constant 0 : index
    %3 = vector.load %arg3[%c0, %c0_1] : memref<16x32xf32, #tpu.memory_space<vmem>>, vector<16x32xf32>
    %c0_2 = arith.constant 0 : index
    %c0_3 = arith.constant 0 : index
    %4 = vector.load %arg13[%c0_2, %c0_3] : memref<16x32xf32, #tpu.memory_space<vmem>>, vector<16x32xf32>
    %c0_4 = arith.constant 0 : index
    %c0_5 = arith.constant 0 : index
    %5 = vector.load %arg4[%c0_4, %c0_5] : memref<32x32xf32, #tpu.memory_space<vmem>>, vector<32x32xf32>
    %cst = arith.constant dense<0.000000e+00> : vector<16x32xf32>
    %6 = tpu.matmul %3, %5, %cst {dimension_numbers = #tpu.dot_dimension_numbers<[1], [1], [0], [0], [0, 0, 1, 0], [], []>} : vector<16x32xf32>, vector<32x32xf32>, vector<16x32xf32> -> vector<16x32xf32>
    %7 = arith.addf %4, %6 : vector<16x32xf32>
    %c0_6 = arith.constant 0 : index
    %c0_7 = arith.constant 0 : index
    %8 = vector.load %arg13[%c0_6, %c0_7] : memref<16x32xf32, #tpu.memory_space<vmem>>, vector<16x32xf32>
    tpu.vector_store %arg13[%c0_6, %c0_7], %7 {strides = array<i32>} : memref<16x32xf32, #tpu.memory_space<vmem>>, vector<16x32xf32>,
    %c0_8 = arith.constant 0 : index
    %c0_9 = arith.constant 0 : index
    %9 = vector.load %arg14[%c0_8, %c0_9] : memref<16x32xf32, #tpu.memory_space<vmem>>, vector<16x32xf32>
    %c0_10 = arith.constant 0 : index
    %c0_11 = arith.constant 0 : index
    %10 = vector.load %arg5[%c0_10, %c0_11] : memref<32x32xf32, #tpu.memory_space<vmem>>, vector<32x32xf32>
    %cst_12 = arith.constant dense<0.000000e+00> : vector<16x32xf32>
    %11 = tpu.matmul %3, %10, %cst_12 {dimension_numbers = #tpu.dot_dimension_numbers<[1], [1], [0], [0], [0, 0, 1, 0], [], []>} : vector<16x32xf32>, vector<32x32xf32>, vector<16x32xf32> -> vector<16x32xf32>
    %12 = arith.addf %9, %11 : vector<16x32xf32>
    %c0_13 = arith.constant 0 : index
    %c0_14 = arith.constant 0 : index
    %13 = vector.load %arg14[%c0_13, %c0_14] : memref<16x32xf32, #tpu.memory_space<vmem>>, vector<16x32xf32>
    tpu.vector_store %arg14[%c0_13, %c0_14], %12 {strides = array<i32>} : memref<16x32xf32, #tpu.memory_space<vmem>>, vector<16x32xf32>,
    %c0_15 = arith.constant 0 : index
    %c0_16 = arith.constant 0 : index
    %14 = vector.load %arg15[%c0_15, %c0_16] : memref<16x32xf32, #tpu.memory_space<vmem>>, vector<16x32xf32>
    %c0_17 = arith.constant 0 : index
    %c0_18 = arith.constant 0 : index
    %15 = vector.load %arg6[%c0_17, %c0_18] : memref<32x32xf32, #tpu.memory_space<vmem>>, vector<32x32xf32>
    %cst_19 = arith.constant dense<0.000000e+00> : vector<16x32xf32>
    %16 = tpu.matmul %3, %15, %cst_19 {dimension_numbers = #tpu.dot_dimension_numbers<[1], [1], [0], [0], [0, 0, 1, 0], [], []>} : vector<16x32xf32>, vector<32x32xf32>, vector<16x32xf32> -> vector<16x32xf32>
    %17 = arith.addf %14, %16 : vector<16x32xf32>
    %c0_20 = arith.constant 0 : index
    %c0_21 = arith.constant 0 : index
    %18 = vector.load %arg15[%c0_20, %c0_21] : memref<16x32xf32, #tpu.memory_space<vmem>>, vector<16x32xf32>
    tpu.vector_store %arg15[%c0_20, %c0_21], %17 {strides = array<i32>} : memref<16x32xf32, #tpu.memory_space<vmem>>, vector<16x32xf32>,
    %c0_i32_22 = arith.constant 0 : i32
    %19 = arith.cmpi eq, %arg2, %c0_i32_22 : i32
    %20 = arith.extui %19 : i1 to i32
    %c0_i32_23 = arith.constant 0 : i32
    %21 = arith.cmpi ne, %20, %c0_i32_23 : i32
    scf.if %21 {
      %c0_24 = arith.constant 0 : index
      %c0_25 = arith.constant 0 : index
      %22 = vector.load %arg13[%c0_24, %c0_25] : memref<16x32xf32, #tpu.memory_space<vmem>>, vector<16x32xf32>
      %c0_26 = arith.constant 0 : index
      %c0_27 = arith.constant 0 : index
      %23 = vector.load %arg7[%c0_26, %c0_27] : memref<1x32xf32, #tpu.memory_space<vmem>>, vector<1x32xf32>
      %24 = vector.broadcast %23 : vector<1x32xf32> to vector<16x32xf32>
      %25 = arith.addf %22, %24 : vector<16x32xf32>
      %c0_28 = arith.constant 0 : index
      %c0_29 = arith.constant 0 : index
      %26 = vector.load %arg10[%c0_28, %c0_29] : memref<16x32xf32, #tpu.memory_space<vmem>>, vector<16x32xf32>
      tpu.vector_store %arg10[%c0_28, %c0_29], %25 {strides = array<i32>} : memref<16x32xf32, #tpu.memory_space<vmem>>, vector<16x32xf32>,
      %c0_30 = arith.constant 0 : index
      %c0_31 = arith.constant 0 : index
      %27 = vector.load %arg14[%c0_30, %c0_31] : memref<16x32xf32, #tpu.memory_space<vmem>>, vector<16x32xf32>
      %c0_32 = arith.constant 0 : index
      %c0_33 = arith.constant 0 : index
      %28 = vector.load %arg8[%c0_32, %c0_33] : memref<1x32xf32, #tpu.memory_space<vmem>>, vector<1x32xf32>
      %29 = vector.broadcast %28 : vector<1x32xf32> to vector<16x32xf32>
      %30 = arith.addf %27, %29 : vector<16x32xf32>
      %c0_34 = arith.constant 0 : index
      %c0_35 = arith.constant 0 : index
      %31 = vector.load %arg11[%c0_34, %c0_35] : memref<16x32xf32, #tpu.memory_space<vmem>>, vector<16x32xf32>
      tpu.vector_store %arg11[%c0_34, %c0_35], %30 {strides = array<i32>} : memref<16x32xf32, #tpu.memory_space<vmem>>, vector<16x32xf32>,
      %c0_36 = arith.constant 0 : index
      %c0_37 = arith.constant 0 : index
      %32 = vector.load %arg15[%c0_36, %c0_37] : memref<16x32xf32, #tpu.memory_space<vmem>>, vector<16x32xf32>
      %c0_38 = arith.constant 0 : index
      %c0_39 = arith.constant 0 : index
      %33 = vector.load %arg9[%c0_38, %c0_39] : memref<1x32xf32, #tpu.memory_space<vmem>>, vector<1x32xf32>
      %34 = vector.broadcast %33 : vector<1x32xf32> to vector<16x32xf32>
      %35 = arith.addf %32, %34 : vector<16x32xf32>
      %c0_40 = arith.constant 0 : index
      %c0_41 = arith.constant 0 : index
      %36 = vector.load %arg12[%c0_40, %c0_41] : memref<16x32xf32, #tpu.memory_space<vmem>>, vector<16x32xf32>
      tpu.vector_store %arg12[%c0_40, %c0_41], %35 {strides = array<i32>} : memref<16x32xf32, #tpu.memory_space<vmem>>, vector<16x32xf32>,
    } else {
    }
    return
  }
  func.func @transform_0(%arg0: i32, %arg1: i32, %arg2: i32) -> (i32, i32) {
    %c0_i32 = arith.constant 0 : i32
    return %arg0, %arg2 : i32, i32
  }
  func.func @transform_1(%arg0: i32, %arg1: i32, %arg2: i32) -> (i32, i32) {
    %c0_i32 = arith.constant 0 : i32
    return %arg1, %arg2 : i32, i32
  }
  func.func @transform_2(%arg0: i32, %arg1: i32, %arg2: i32) -> (i32, i32) {
    %c0_i32 = arith.constant 0 : i32
    return %arg1, %arg2 : i32, i32
  }
  func.func @transform_3(%arg0: i32, %arg1: i32, %arg2: i32) -> (i32, i32) {
    %c0_i32 = arith.constant 0 : i32
    return %arg1, %arg2 : i32, i32
  }
  func.func @transform_4(%arg0: i32, %arg1: i32, %arg2: i32) -> (i32, i32) {
    %c0_i32 = arith.constant 0 : i32
    %c0_i32_0 = arith.constant 0 : i32
    return %c0_i32, %arg1 : i32, i32
  }
  func.func @transform_5(%arg0: i32, %arg1: i32, %arg2: i32) -> (i32, i32) {
    %c0_i32 = arith.constant 0 : i32
    %c0_i32_0 = arith.constant 0 : i32
    return %c0_i32, %arg1 : i32, i32
  }
  func.func @transform_6(%arg0: i32, %arg1: i32, %arg2: i32) -> (i32, i32) {
    %c0_i32 = arith.constant 0 : i32
    %c0_i32_0 = arith.constant 0 : i32
    return %c0_i32, %arg1 : i32, i32
  }
  func.func @transform_7(%arg0: i32, %arg1: i32, %arg2: i32) -> (i32, i32) {
    %c0_i32 = arith.constant 0 : i32
    return %arg0, %arg1 : i32, i32
  }
  func.func @transform_8(%arg0: i32, %arg1: i32, %arg2: i32) -> (i32, i32) {
    %c0_i32 = arith.constant 0 : i32
    return %arg0, %arg1 : i32, i32
  }
  func.func @transform_9(%arg0: i32, %arg1: i32, %arg2: i32) -> (i32, i32) {
    %c0_i32 = arith.constant 0 : i32
    return %arg0, %arg1 : i32, i32
  }
}

</mosaic_0001>

<llo_original>
// kernel: tpu_custom_call.1
$region0: #{tpu_custom_call.1}
  #allocation0 [shape = 'u32[]', space=smem, size = 0x4, offset = 0x4, fixed_abs, tag = 'smem constant byte address 0x4 - core index']
  #allocation1 [shape = 'u32[144,128]{1,0:T(1,128)}', space=vmem, size = 0x12000, scoped, tag = 'internal scratch']
  #allocation2 [shape = 'f32[16,32]{1,0:T(8,128)}', space=vmem, size = 0x2000, scoped, tag = 'scratch operand']
  #allocation3 [shape = 'f32[16,32]{1,0:T(8,128)}', space=vmem, size = 0x2000, scoped, tag = 'scratch operand']
  #allocation4 [shape = 'f32[16,32]{1,0:T(8,128)}', space=vmem, size = 0x2000, scoped, tag = 'scratch operand']
  %s0 = inlined_call_operand.hbm [shape: f32[16,32], index: 0, kind: input, shape index: {}]
  %s1 = inlined_call_operand.hbm [shape: f32[32,32], index: 1, kind: input, shape index: {}]
  %s2 = inlined_call_operand.hbm [shape: f32[32,32], index: 2, kind: input, shape index: {}]
  %s3 = inlined_call_operand.hbm [shape: f32[32,32], index: 3, kind: input, shape index: {}]
  %s4 = inlined_call_operand.vmem [shape: f32[1,32], index: 4, kind: input, shape index: {}]
  %s5 = inlined_call_operand.vmem [shape: f32[1,32], index: 5, kind: input, shape index: {}]
  %s6 = inlined_call_operand.vmem [shape: f32[1,32], index: 6, kind: input, shape index: {}]
  %s7 = inlined_call_operand.hbm [shape: f32[16,32], index: 7, kind: output, shape index: {0}]
  %s8 = inlined_call_operand.hbm [shape: f32[16,32], index: 8, kind: output, shape index: {1}]
  %s9 = inlined_call_operand.hbm [shape: f32[16,32], index: 9, kind: output, shape index: {2}]
  %10 = xla_tuple %s7, %s8, %s9
  %s11 = sld [smem:[#allocation0]]
  $region78: #{tpu_custom_call.1} parent=0
    _
  %s13 = ssub.s32 1, %s11
  %s14 = scalar_select 0, %s13, %s11
  $region1: #{tpu_custom_call.1} parent=0
    #allocation5 [shape = 'u8[8192]{0}', space=vmem, size = 0x2000, scoped, tag = 'input window, operand 0, single buffered']
    #allocation6 [shape = 's32[1]{0}', space=sflag, size = 0x4, scoped, tag = 'scoped memory for tpu_custom_call.1']
    #allocation7 [shape = 's32[1]{0}', space=sflag, size = 0x4, scoped, tag = 'scoped memory for tpu_custom_call.1']
    #allocation8 [shape = 'u8[16384]{0}', space=vmem, size = 0x4000, scoped, tag = 'input window, operand 1, single buffered']
    #allocation9 [shape = 's32[1]{0}', space=sflag, size = 0x4, scoped, tag = 'scoped memory for tpu_custom_call.1']
    #allocation10 [shape = 'u8[16384]{0}', space=vmem, size = 0x4000, scoped, tag = 'input window, operand 2, single buffered']
    #allocation11 [shape = 'u8[16384]{0}', space=vmem, size = 0x4000, scoped, tag = 'input window, operand 3, single buffered']
    #allocation12 [shape = 's32[1]{0}', space=sflag, size = 0x4, scoped, tag = 'scoped memory for tpu_custom_call.1']
    #allocation13 [shape = 'u8[8192]{0}', space=vmem, size = 0x2000, scoped, tag = 'output window, operand 0, single buffered']
    #allocation14 [shape = 'u8[8192]{0}', space=vmem, size = 0x2000, scoped, tag = 'output window, operand 1, single buffered']
    #allocation15 [shape = 's32[1]{0}', space=sflag, size = 0x4, scoped, tag = 'scoped memory for tpu_custom_call.1']
    #allocation16 [shape = 'u8[8192]{0}', space=vmem, size = 0x2000, scoped, tag = 'output window, operand 2, single buffered']
    %15 = vsyncpa [#allocation6], 0
    %16 = vsyncpa [#allocation9], 0
    %17 = vsyncpa [#allocation12], 0
    %18 = vsyncpa [#allocation7], 0
    %19 = vsyncpa [#allocation15], 0
    // Predicated region
    $region2: #{tpu_custom_call.1} parent=1 // pred_check
      _
    $region3: #{tpu_custom_call.1} parent=1 // pred_check_branch
      %21 = sbr.rel (0) target = $region5
    $region4: #{tpu_custom_call.1} parent=1 // pred_region
      %s23 = ssub.s32 256, 256
      %24 = vsyncadd [#allocation6], %s23
      %s25 = sshll.u32 [#allocation5], 4
      %s26 = int_to_ptr.vmem [resolvable:$true] %s25
      %31 = dma.hbm_to_vmem [thread:$0]  %s0, 256, %s26, [#allocation6], 128, 128, 8
    $region5: #{tpu_custom_call.1} parent=1 // pred_fallthru
      _
    // Predicated region
    $region6: #{tpu_custom_call.1} parent=1 // pred_check
      _
    $region7: #{tpu_custom_call.1} parent=1 // pred_check_branch
      %33 = sbr.rel (0) target = $region9
    $region8: #{tpu_custom_call.1} parent=1 // pred_region
      %s35 = ssub.s32 512, 512
      %36 = vsyncadd [#allocation9], %s35
      %s37 = sshll.u32 [#allocation8], 4
      %s38 = int_to_ptr.vmem [resolvable:$true] %s37
      %43 = dma.hbm_to_vmem [thread:$0]  %s1, 512, %s38, [#allocation9], 128, 128, 8
    $region9: #{tpu_custom_call.1} parent=1 // pred_fallthru
      _
    // Predicated region
    $region10: #{tpu_custom_call.1} parent=1 // pred_check
      _
    $region11: #{tpu_custom_call.1} parent=1 // pred_check_branch
      %45 = sbr.rel (0) target = $region13
    $region12: #{tpu_custom_call.1} parent=1 // pred_region
      %s47 = ssub.s32 512, 512
      %48 = vsyncadd [#allocation9], %s47
      %s49 = sshll.u32 [#allocation10], 4
      %s50 = int_to_ptr.vmem [resolvable:$true] %s49
      %55 = dma.hbm_to_vmem [thread:$0]  %s2, 512, %s50, [#allocation9], 128, 128, 8
    $region13: #{tpu_custom_call.1} parent=1 // pred_fallthru
      _
    // Predicated region
    $region14: #{tpu_custom_call.1} parent=1 // pred_check
      _
    $region15: #{tpu_custom_call.1} parent=1 // pred_check_branch
      %57 = sbr.rel (0) target = $region17
    $region16: #{tpu_custom_call.1} parent=1 // pred_region
      %s59 = ssub.s32 512, 512
      %60 = vsyncadd [#allocation12], %s59
      %s61 = sshll.u32 [#allocation11], 4
      %s62 = int_to_ptr.vmem [resolvable:$true] %s61
      %67 = dma.hbm_to_vmem [thread:$0]  %s3, 512, %s62, [#allocation12], 128, 128, 8
    $region17: #{tpu_custom_call.1} parent=1 // pred_fallthru
      _
    // Predicated region
    $region18: #{tpu_custom_call.1} parent=1 // pred_check
      _
    $region19: #{tpu_custom_call.1} parent=1 // pred_check_branch
      %69 = sbr.rel (0) target = $region21
    $region20: #{tpu_custom_call.1} parent=1 // pred_region
      _
    $region21: #{tpu_custom_call.1} parent=1 // pred_fallthru
      _
    // Predicated region
    $region22: #{tpu_custom_call.1} parent=1 // pred_check
      _
    $region23: #{tpu_custom_call.1} parent=1 // pred_check_branch
      %71 = sbr.rel (0) target = $region25
    $region24: #{tpu_custom_call.1} parent=1 // pred_region
      _
    $region25: #{tpu_custom_call.1} parent=1 // pred_fallthru
      _
    // Predicated region
    $region26: #{tpu_custom_call.1} parent=1 // pred_check
      _
    $region27: #{tpu_custom_call.1} parent=1 // pred_check_branch
      %73 = sbr.rel (0) target = $region29
    $region28: #{tpu_custom_call.1} parent=1 // pred_region
      _
    $region29: #{tpu_custom_call.1} parent=1 // pred_fallthru
      _
    // Predicated region
    $region30: #{tpu_custom_call.1} parent=1 // pred_check
      _
    $region31: #{tpu_custom_call.1} parent=1 // pred_check_branch
      %75 = sbr.rel (0) target = $region33
    $region32: #{tpu_custom_call.1} parent=1 // pred_region
      %76 = dma.done [#allocation6], 256
    $region33: #{tpu_custom_call.1} parent=1 // pred_fallthru
      _
    // Predicated region
    $region34: #{tpu_custom_call.1} parent=1 // pred_check
      _
    $region35: #{tpu_custom_call.1} parent=1 // pred_check_branch
      %78 = sbr.rel (0) target = $region37
    $region36: #{tpu_custom_call.1} parent=1 // pred_region
      %79 = dma.done [#allocation9], 512
    $region37: #{tpu_custom_call.1} parent=1 // pred_fallthru
      _
    // Predicated region
    $region38: #{tpu_custom_call.1} parent=1 // pred_check
      _
    $region39: #{tpu_custom_call.1} parent=1 // pred_check_branch
      %81 = sbr.rel (0) target = $region41
    $region40: #{tpu_custom_call.1} parent=1 // pred_region
      %82 = dma.done [#allocation9], 512
    $region41: #{tpu_custom_call.1} parent=1 // pred_fallthru
      _
    // Predicated region
    $region42: #{tpu_custom_call.1} parent=1 // pred_check
      _
    $region43: #{tpu_custom_call.1} parent=1 // pred_check_branch
      %84 = sbr.rel (0) target = $region45
    $region44: #{tpu_custom_call.1} parent=1 // pred_region
      %85 = dma.done [#allocation12], 512
    $region45: #{tpu_custom_call.1} parent=1 // pred_fallthru
      _
    %p86 = scmp.eq.s32.totalorder 0, 0
    // Predicated region
    $region46: #{tpu_custom_call.1} parent=1 // pred_check
      %p87 = pneg %p86
    $region47: #{tpu_custom_call.1} parent=1 // pred_check_branch
      %89 = sbr.rel (%p87) target = $region49
    $region48: #{tpu_custom_call.1} parent=1 // pred_region
      %vm90 = vcmask 261120
      %91 = vst.msk [vmem:[#allocation2] sm:$0xff] %vm90, 0.0
      %92 = vst.msk [vmem:[#allocation2 + $0x8] sm:$0xff] %vm90, 0.0
      %93 = vst.msk [vmem:[#allocation3] sm:$0xff] %vm90, 0.0
      %94 = vst.msk [vmem:[#allocation3 + $0x8] sm:$0xff] %vm90, 0.0
      %95 = vst.msk [vmem:[#allocation4] sm:$0xff] %vm90, 0.0
      %96 = vst.msk [vmem:[#allocation4 + $0x8] sm:$0xff] %vm90, 0.0
    $region49: #{tpu_custom_call.1} parent=1 // pred_fallthru
      _
    %v97 = vld [vmem:[#allocation5] sm:$0xff]
    %v98 = vld [vmem:[#allocation5 + $0x8] sm:$0xff]
    %v99 = vld [vmem:[#allocation2] sm:$0xff]
    %v100 = vld [vmem:[#allocation2 + $0x8] sm:$0xff]
    %v101 = vld [vmem:[#allocation8] sm:$0xff]
    %v102 = vld [vmem:[#allocation8 + $0x8] sm:$0xff]
    %v103 = vld [vmem:[#allocation8 + $0x10] sm:$0xff]
    %v104 = vld [vmem:[#allocation8 + $0x18] sm:$0xff]
    %vm105 = vcmask 261120
    %v107 = vsel %vm105, %v97, 0
    %v110 = vsel %vm105, %v98, 0
    %v113 = vsel %vm105, %v101, 0
    %v116 = vsel %vm105, %v102, 0
    %v119 = vsel %vm105, %v103, 0
    %v122 = vsel %vm105, %v104, 0
    %124 = vmatprep.subr.mxu0 0.0
    %125 = vmatpush1.xpose.msra.mxu0 0.0
    %126 = vmatprep.subr.mxu0 0.0
    %127 = vmatpush1.xpose.msra.mxu0 0.0
    %128 = vmatprep.subr.mxu0 0.0
    %129 = vmatpush1.xpose.msra.mxu0 0.0
    %130 = vmatprep.subr.mxu0 0.0
    %131 = vmatpush1.xpose.msra.mxu0 0.0
    %132 = vmatprep.subr.mxu0 0.0
    %133 = vmatpush1.xpose.msra.mxu0 0.0
    %134 = vmatprep.subr.mxu0 0.0
    %135 = vmatpush1.xpose.msra.mxu0 0.0
    %136 = vmatprep.subr.mxu0 0.0
    %137 = vmatpush1.xpose.msra.mxu0 0.0
    %138 = vmatprep.subr.mxu0 0.0
    %139 = vmatpush1.xpose.msra.mxu0 0.0
    %140 = vmatprep.subr.mxu0 0.0
    %141 = vmatpush1.xpose.msra.mxu0 0.0
    %142 = vmatprep.subr.mxu0 0.0
    %143 = vmatpush1.xpose.msra.mxu0 0.0
    %144 = vmatprep.subr.mxu0 0.0
    %145 = vmatpush1.xpose.msra.mxu0 0.0
    %146 = vmatprep.subr.mxu0 0.0
    %147 = vmatpush1.xpose.msra.mxu0 0.0
    %148 = vmatprep.subr.mxu0 0.0
    %149 = vmatpush1.xpose.msra.mxu0 %v122
    %150 = vmatprep.subr.mxu0 0.0
    %151 = vmatpush1.xpose.msra.mxu0 %v119
    %152 = vmatprep.subr.mxu0 0.0
    %153 = vmatpush1.xpose.msra.mxu0 %v116
    %154 = vmatprep.subr.mxu0 0.0
    %155 = vmatpush1.xpose.msra.mxu0 %v113
    %156 = vmatprep.subr.mxu0 0.0
    %157 = vmatpush2.xpose.msra.mxu0 0.0
    %158 = vmatprep.subr.mxu0 0.0
    %159 = vmatpush2.xpose.msra.mxu0 0.0
    %160 = vmatprep.subr.mxu0 0.0
    %161 = vmatpush2.xpose.msra.mxu0 0.0
    %162 = vmatprep.subr.mxu0 0.0
    %163 = vmatpush2.xpose.msra.mxu0 0.0
    %164 = vmatprep.subr.mxu0 0.0
    %165 = vmatpush2.xpose.msra.mxu0 0.0
    %166 = vmatprep.subr.mxu0 0.0
    %167 = vmatpush2.xpose.msra.mxu0 0.0
    %168 = vmatprep.subr.mxu0 0.0
    %169 = vmatpush2.xpose.msra.mxu0 0.0
    %170 = vmatprep.subr.mxu0 0.0
    %171 = vmatpush2.xpose.msra.mxu0 0.0
    %172 = vmatprep.subr.mxu0 0.0
    %173 = vmatpush2.xpose.msra.mxu0 0.0
    %174 = vmatprep.subr.mxu0 0.0
    %175 = vmatpush2.xpose.msra.mxu0 0.0
    %176 = vmatprep.subr.mxu0 0.0
    %177 = vmatpush2.xpose.msra.mxu0 0.0
    %178 = vmatprep.subr.mxu0 0.0
    %179 = vmatpush2.xpose.msra.mxu0 0.0
    %180 = vmatprep.subr.mxu0 0.0
    %181 = vmatpush2.xpose.msra.mxu0 0.0
    %182 = vmatprep.subr.mxu0 0.0
    %183 = vmatpush2.xpose.msra.mxu0 0.0
    %184 = vmatprep.subr.mxu0 0.0
    %185 = vmatpush2.xpose.msra.mxu0 0.0
    %186 = vmatprep.subr.mxu0 0.0
    %187 = vmatpush2.xpose.msra.mxu0 0.0
    %188 = vmatprep.mubr.f32.mxu0 0.0
    %189 = vmatmul.mubr.f32.gmra.mxu0 %v107
    %v190 = vpop.f32.mrf.mxu0
    %v191 = vadd.f32 0.0, %v190
    %v192 = vpop.f32.mrf.mxu0
    %193 = vmatprep.mubr.f32.mxu0 0.0
    %194 = vmatmul.mubr.f32.gmra.mxu0 %v110
    %v195 = vpop.f32.mrf.mxu0
    %v196 = vadd.f32 0.0, %v195
    %v197 = vpop.f32.mrf.mxu0
    %198 = vdwg.mxu0
    %v199 = vadd.f32 %v99, %v191
    %v200 = vadd.f32 %v100, %v196
    %201 = vst.msk [vmem:[#allocation2] sm:$0xff] %vm105, %v199
    %202 = vst.msk [vmem:[#allocation2 + $0x8] sm:$0xff] %vm105, %v200
    %v203 = vld [vmem:[#allocation3] sm:$0xff]
    %v204 = vld [vmem:[#allocation3 + $0x8] sm:$0xff]
    %v205 = vld [vmem:[#allocation10] sm:$0xff]
    %v206 = vld [vmem:[#allocation10 + $0x8] sm:$0xff]
    %v207 = vld [vmem:[#allocation10 + $0x10] sm:$0xff]
    %v208 = vld [vmem:[#allocation10 + $0x18] sm:$0xff]
    %v210 = vsel %vm105, %v205, 0
    %v213 = vsel %vm105, %v206, 0
    %v216 = vsel %vm105, %v207, 0
    %v219 = vsel %vm105, %v208, 0
    %221 = vmatprep.subr.mxu0 0.0
    %222 = vmatpush1.xpose.msra.mxu0 0.0
    %223 = vmatprep.subr.mxu0 0.0
    %224 = vmatpush1.xpose.msra.mxu0 0.0
    %225 = vmatprep.subr.mxu0 0.0
    %226 = vmatpush1.xpose.msra.mxu0 0.0
    %227 = vmatprep.subr.mxu0 0.0
    %228 = vmatpush1.xpose.msra.mxu0 0.0
    %229 = vmatprep.subr.mxu0 0.0
    %230 = vmatpush1.xpose.msra.mxu0 0.0
    %231 = vmatprep.subr.mxu0 0.0
    %232 = vmatpush1.xpose.msra.mxu0 0.0
    %233 = vmatprep.subr.mxu0 0.0
    %234 = vmatpush1.xpose.msra.mxu0 0.0
    %235 = vmatprep.subr.mxu0 0.0
    %236 = vmatpush1.xpose.msra.mxu0 0.0
    %237 = vmatprep.subr.mxu0 0.0
    %238 = vmatpush1.xpose.msra.mxu0 0.0
    %239 = vmatprep.subr.mxu0 0.0
    %240 = vmatpush1.xpose.msra.mxu0 0.0
    %241 = vmatprep.subr.mxu0 0.0
    %242 = vmatpush1.xpose.msra.mxu0 0.0
    %243 = vmatprep.subr.mxu0 0.0
    %244 = vmatpush1.xpose.msra.mxu0 0.0
    %245 = vmatprep.subr.mxu0 0.0
    %246 = vmatpush1.xpose.msra.mxu0 %v219
    %247 = vmatprep.subr.mxu0 0.0
    %248 = vmatpush1.xpose.msra.mxu0 %v216
    %249 = vmatprep.subr.mxu0 0.0
    %250 = vmatpush1.xpose.msra.mxu0 %v213
    %251 = vmatprep.subr.mxu0 0.0
    %252 = vmatpush1.xpose.msra.mxu0 %v210
    %253 = vmatprep.subr.mxu0 0.0
    %254 = vmatpush2.xpose.msra.mxu0 0.0
    %255 = vmatprep.subr.mxu0 0.0
    %256 = vmatpush2.xpose.msra.mxu0 0.0
    %257 = vmatprep.subr.mxu0 0.0
    %258 = vmatpush2.xpose.msra.mxu0 0.0
    %259 = vmatprep.subr.mxu0 0.0
    %260 = vmatpush2.xpose.msra.mxu0 0.0
    %261 = vmatprep.subr.mxu0 0.0
    %262 = vmatpush2.xpose.msra.mxu0 0.0
    %263 = vmatprep.subr.mxu0 0.0
    %264 = vmatpush2.xpose.msra.mxu0 0.0
    %265 = vmatprep.subr.mxu0 0.0
    %266 = vmatpush2.xpose.msra.mxu0 0.0
    %267 = vmatprep.subr.mxu0 0.0
    %268 = vmatpush2.xpose.msra.mxu0 0.0
    %269 = vmatprep.subr.mxu0 0.0
    %270 = vmatpush2.xpose.msra.mxu0 0.0
    %271 = vmatprep.subr.mxu0 0.0
    %272 = vmatpush2.xpose.msra.mxu0 0.0
    %273 = vmatprep.subr.mxu0 0.0
    %274 = vmatpush2.xpose.msra.mxu0 0.0
    %275 = vmatprep.subr.mxu0 0.0
    %276 = vmatpush2.xpose.msra.mxu0 0.0
    %277 = vmatprep.subr.mxu0 0.0
    %278 = vmatpush2.xpose.msra.mxu0 0.0
    %279 = vmatprep.subr.mxu0 0.0
    %280 = vmatpush2.xpose.msra.mxu0 0.0
    %281 = vmatprep.subr.mxu0 0.0
    %282 = vmatpush2.xpose.msra.mxu0 0.0
    %283 = vmatprep.subr.mxu0 0.0
    %284 = vmatpush2.xpose.msra.mxu0 0.0
    %285 = vmatprep.mubr.f32.mxu0 0.0
    %286 = vmatmul.mubr.f32.gmra.mxu0 %v107
    %v287 = vpop.f32.mrf.mxu0
    %v288 = vadd.f32 0.0, %v287
    %v289 = vpop.f32.mrf.mxu0
    %290 = vmatprep.mubr.f32.mxu0 0.0
    %291 = vmatmul.mubr.f32.gmra.mxu0 %v110
    %v292 = vpop.f32.mrf.mxu0
    %v293 = vadd.f32 0.0, %v292
    %v294 = vpop.f32.mrf.mxu0
    %295 = vdwg.mxu0
    %v296 = vadd.f32 %v203, %v288
    %v297 = vadd.f32 %v204, %v293
    %298 = vst.msk [vmem:[#allocation3] sm:$0xff] %vm105, %v296
    %299 = vst.msk [vmem:[#allocation3 + $0x8] sm:$0xff] %vm105, %v297
    %v300 = vld [vmem:[#allocation4] sm:$0xff]
    %v301 = vld [vmem:[#allocation4 + $0x8] sm:$0xff]
    %v302 = vld [vmem:[#allocation11] sm:$0xff]
    %v303 = vld [vmem:[#allocation11 + $0x8] sm:$0xff]
    %v304 = vld [vmem:[#allocation11 + $0x10] sm:$0xff]
    %v305 = vld [vmem:[#allocation11 + $0x18] sm:$0xff]
    %v307 = vsel %vm105, %v302, 0
    %v310 = vsel %vm105, %v303, 0
    %v313 = vsel %vm105, %v304, 0
    %v316 = vsel %vm105, %v305, 0
    %318 = vmatprep.subr.mxu0 0.0
    %319 = vmatpush1.xpose.msra.mxu0 0.0
    %320 = vmatprep.subr.mxu0 0.0
    %321 = vmatpush1.xpose.msra.mxu0 0.0
    %322 = vmatprep.subr.mxu0 0.0
    %323 = vmatpush1.xpose.msra.mxu0 0.0
    %324 = vmatprep.subr.mxu0 0.0
    %325 = vmatpush1.xpose.msra.mxu0 0.0
    %326 = vmatprep.subr.mxu0 0.0
    %327 = vmatpush1.xpose.msra.mxu0 0.0
    %328 = vmatprep.subr.mxu0 0.0
    %329 = vmatpush1.xpose.msra.mxu0 0.0
    %330 = vmatprep.subr.mxu0 0.0
    %331 = vmatpush1.xpose.msra.mxu0 0.0
    %332 = vmatprep.subr.mxu0 0.0
    %333 = vmatpush1.xpose.msra.mxu0 0.0
    %334 = vmatprep.subr.mxu0 0.0
    %335 = vmatpush1.xpose.msra.mxu0 0.0
    %336 = vmatprep.subr.mxu0 0.0
    %337 = vmatpush1.xpose.msra.mxu0 0.0
    %338 = vmatprep.subr.mxu0 0.0
    %339 = vmatpush1.xpose.msra.mxu0 0.0
    %340 = vmatprep.subr.mxu0 0.0
    %341 = vmatpush1.xpose.msra.mxu0 0.0
    %342 = vmatprep.subr.mxu0 0.0
    %343 = vmatpush1.xpose.msra.mxu0 %v316
    %344 = vmatprep.subr.mxu0 0.0
    %345 = vmatpush1.xpose.msra.mxu0 %v313
    %346 = vmatprep.subr.mxu0 0.0
    %347 = vmatpush1.xpose.msra.mxu0 %v310
    %348 = vmatprep.subr.mxu0 0.0
    %349 = vmatpush1.xpose.msra.mxu0 %v307
    %350 = vmatprep.subr.mxu0 0.0
    %351 = vmatpush2.xpose.msra.mxu0 0.0
    %352 = vmatprep.subr.mxu0 0.0
    %353 = vmatpush2.xpose.msra.mxu0 0.0
    %354 = vmatprep.subr.mxu0 0.0
    %355 = vmatpush2.xpose.msra.mxu0 0.0
    %356 = vmatprep.subr.mxu0 0.0
    %357 = vmatpush2.xpose.msra.mxu0 0.0
    %358 = vmatprep.subr.mxu0 0.0
    %359 = vmatpush2.xpose.msra.mxu0 0.0
    %360 = vmatprep.subr.mxu0 0.0
    %361 = vmatpush2.xpose.msra.mxu0 0.0
    %362 = vmatprep.subr.mxu0 0.0
    %363 = vmatpush2.xpose.msra.mxu0 0.0
    %364 = vmatprep.subr.mxu0 0.0
    %365 = vmatpush2.xpose.msra.mxu0 0.0
    %366 = vmatprep.subr.mxu0 0.0
    %367 = vmatpush2.xpose.msra.mxu0 0.0
    %368 = vmatprep.subr.mxu0 0.0
    %369 = vmatpush2.xpose.msra.mxu0 0.0
    %370 = vmatprep.subr.mxu0 0.0
    %371 = vmatpush2.xpose.msra.mxu0 0.0
    %372 = vmatprep.subr.mxu0 0.0
    %373 = vmatpush2.xpose.msra.mxu0 0.0
    %374 = vmatprep.subr.mxu0 0.0
    %375 = vmatpush2.xpose.msra.mxu0 0.0
    %376 = vmatprep.subr.mxu0 0.0
    %377 = vmatpush2.xpose.msra.mxu0 0.0
    %378 = vmatprep.subr.mxu0 0.0
    %379 = vmatpush2.xpose.msra.mxu0 0.0
    %380 = vmatprep.subr.mxu0 0.0
    %381 = vmatpush2.xpose.msra.mxu0 0.0
    %382 = vmatprep.mubr.f32.mxu0 0.0
    %383 = vmatmul.mubr.f32.gmra.mxu0 %v107
    %v384 = vpop.f32.mrf.mxu0
    %v385 = vadd.f32 0.0, %v384
    %v386 = vpop.f32.mrf.mxu0
    %387 = vmatprep.mubr.f32.mxu0 0.0
    %388 = vmatmul.mubr.f32.gmra.mxu0 %v110
    %v389 = vpop.f32.mrf.mxu0
    %v390 = vadd.f32 0.0, %v389
    %v391 = vpop.f32.mrf.mxu0
    %392 = vdwg.mxu0
    %v393 = vadd.f32 %v300, %v385
    %v394 = vadd.f32 %v301, %v390
    %395 = vst.msk [vmem:[#allocation4] sm:$0xff] %vm105, %v393
    %396 = vst.msk [vmem:[#allocation4 + $0x8] sm:$0xff] %vm105, %v394
    // Predicated region
    $region50: #{tpu_custom_call.1} parent=1 // pred_check
      %p397 = pneg %p86
    $region51: #{tpu_custom_call.1} parent=1 // pred_check_branch
      %399 = sbr.rel (%p397) target = $region53
    $region52: #{tpu_custom_call.1} parent=1 // pred_region
      %v400 = vld [vmem:[#allocation2] sm:$0xff]
      %v401 = vld [vmem:[#allocation2 + $0x8] sm:$0xff]
      %v402 = vld [vmem:[%s4] sm:$0x1]
      %v404 = vlaneseq
      %v405 = vshrl.u32 %v404, 7
      %v406 = vsub.s32 0, %v405
      %v407 = vrot.slane %v402, %v406
      %v409 = vadd.f32 %v400, %v407
      %v410 = vadd.f32 %v401, %v407
      %411 = vst.msk [vmem:[#allocation13] sm:$0xff] %vm105, %v409
      %412 = vst.msk [vmem:[#allocation13 + $0x8] sm:$0xff] %vm105, %v410
      %v413 = vld [vmem:[#allocation3] sm:$0xff]
      %v414 = vld [vmem:[#allocation3 + $0x8] sm:$0xff]
      %v415 = vld [vmem:[%s5] sm:$0x1]
      %v417 = vlaneseq
      %v418 = vshrl.u32 %v417, 7
      %v419 = vsub.s32 0, %v418
      %v420 = vrot.slane %v415, %v419
      %v422 = vadd.f32 %v413, %v420
      %v423 = vadd.f32 %v414, %v420
      %424 = vst.msk [vmem:[#allocation14] sm:$0xff] %vm105, %v422
      %425 = vst.msk [vmem:[#allocation14 + $0x8] sm:$0xff] %vm105, %v423
      %v426 = vld [vmem:[#allocation4] sm:$0xff]
      %v427 = vld [vmem:[#allocation4 + $0x8] sm:$0xff]
      %v428 = vld [vmem:[%s6] sm:$0x1]
      %v430 = vlaneseq
      %v431 = vshrl.u32 %v430, 7
      %v432 = vsub.s32 0, %v431
      %v433 = vrot.slane %v428, %v432
      %v435 = vadd.f32 %v426, %v433
      %v436 = vadd.f32 %v427, %v433
      %437 = vst.msk [vmem:[#allocation16] sm:$0xff] %vm105, %v435
      %438 = vst.msk [vmem:[#allocation16 + $0x8] sm:$0xff] %vm105, %v436
    $region53: #{tpu_custom_call.1} parent=1 // pred_fallthru
      _
    // Predicated region
    $region54: #{tpu_custom_call.1} parent=1 // pred_check
      _
    $region55: #{tpu_custom_call.1} parent=1 // pred_check_branch
      %440 = sbr.rel (0) target = $region57
    $region56: #{tpu_custom_call.1} parent=1 // pred_region
      %s442 = ssub.s32 256, 256
      %443 = vsyncadd [#allocation7], %s442
      %s444 = sshll.u32 [#allocation13], 4
      %s445 = int_to_ptr.vmem [resolvable:$true] %s444
      %450 = dma.vmem_to_hbm [thread:$0]  %s445, 256, %s7, [#allocation7], 128, 128, 8
    $region57: #{tpu_custom_call.1} parent=1 // pred_fallthru
      _
    // Predicated region
    $region58: #{tpu_custom_call.1} parent=1 // pred_check
      _
    $region59: #{tpu_custom_call.1} parent=1 // pred_check_branch
      %452 = sbr.rel (0) target = $region61
    $region60: #{tpu_custom_call.1} parent=1 // pred_region
      %s454 = ssub.s32 256, 256
      %455 = vsyncadd [#allocation15], %s454
      %s456 = sshll.u32 [#allocation14], 4
      %s457 = int_to_ptr.vmem [resolvable:$true] %s456
      %462 = dma.vmem_to_hbm [thread:$0]  %s457, 256, %s8, [#allocation15], 128, 128, 8
    $region61: #{tpu_custom_call.1} parent=1 // pred_fallthru
      _
    // Predicated region
    $region62: #{tpu_custom_call.1} parent=1 // pred_check
      _
    $region63: #{tpu_custom_call.1} parent=1 // pred_check_branch
      %464 = sbr.rel (0) target = $region65
    $region64: #{tpu_custom_call.1} parent=1 // pred_region
      %s466 = ssub.s32 256, 256
      %467 = vsyncadd [#allocation15], %s466
      %s468 = sshll.u32 [#allocation16], 4
      %s469 = int_to_ptr.vmem [resolvable:$true] %s468
      %474 = dma.vmem_to_hbm [thread:$0]  %s469, 256, %s9, [#allocation15], 128, 128, 8
    $region65: #{tpu_custom_call.1} parent=1 // pred_fallthru
      _
    // Predicated region
    $region66: #{tpu_custom_call.1} parent=1 // pred_check
      _
    $region67: #{tpu_custom_call.1} parent=1 // pred_check_branch
      %476 = sbr.rel (0) target = $region69
    $region68: #{tpu_custom_call.1} parent=1 // pred_region
      %477 = dma.done [#allocation7], 256
    $region69: #{tpu_custom_call.1} parent=1 // pred_fallthru
      _
    // Predicated region
    $region70: #{tpu_custom_call.1} parent=1 // pred_check
      _
    $region71: #{tpu_custom_call.1} parent=1 // pred_check_branch
      %479 = sbr.rel (0) target = $region73
    $region72: #{tpu_custom_call.1} parent=1 // pred_region
      %480 = dma.done [#allocation15], 256
    $region73: #{tpu_custom_call.1} parent=1 // pred_fallthru
      _
    // Predicated region
    $region74: #{tpu_custom_call.1} parent=1 // pred_check
      _
    $region75: #{tpu_custom_call.1} parent=1 // pred_check_branch
      %482 = sbr.rel (0) target = $region77
    $region76: #{tpu_custom_call.1} parent=1 // pred_region
      %483 = dma.done [#allocation15], 256
    $region77: #{tpu_custom_call.1} parent=1 // pred_fallthru
      _
    %484 = vsyncpa [#allocation6], 1
    %485 = vsyncpa [#allocation9], 1
    %486 = vsyncpa [#allocation12], 1
    %487 = vsyncpa [#allocation7], 1
    %488 = vsyncpa [#allocation15], 1

</llo_original>
